<compile_context>
chip_gen: v7x
topology: tpu7x:2x2x1
jax: 0.10.0
libtpu: 0.0.40
codegen_flags: <defaults>
</compile_context>

<pallas_src>
import functools
import math

import jax
import jax.numpy as jnp
from jax import lax
from jax.experimental import pallas as pl
from jax.experimental.pallas import tpu as pltpu


def _cal_gamma(v: float) -> float:
    """Same as MyLoss._CalGamma but with math.gamma (no scipy)."""
    a = math.gamma((v + 1.0) / 2.0)
    b = math.sqrt(v * math.pi) * math.gamma(v / 2.0)
    return a / b


def _pick_tile(n: int, align: int, target: int) -> int:
    """Largest multiple of `align` that divides n and is <= target, else n."""
    best = None
    t = align
    limit = min(n, target)
    while t <= limit:
        if n % t == 0:
            best = t
        t += align
    return best if best is not None else n


def _dmt_loss_kernel(
        x_r_ref, x_c_ref, z_r_ref, z_c_ref,
        xx_r_ref, xx_c_ref, zz_r_ref, zz_c_ref,
        rho_r_ref, rho_c_ref, isig_r_ref, isig_c_ref,
        part_ref, disP_ref, disQ_ref, P_ref, Q_ref,
        *, gamma2pi_in, v_in, gamma2pi_lat, v_lat, pow_, tm, tn):
    i = pl.program_id(0)
    j = pl.program_id(1)

    # Per-row-block loss partial, accumulated across the j (lane/"arbitrary")
    # axis on the resident output block.
    @pl.when(j == 0)
    def _init():
        part_ref[...] = jnp.zeros_like(part_ref)

    def sq_dist(a_r, a_c, aa_r, aa_c):
        # (TM, D) . (TN, D) contracting D on both operands -> (TM, TN);
        # no transposed copy is materialized before the MXU.
        cross = lax.dot_general(
            a_r, a_c,
            dimension_numbers=(((1,), (1,)), ((), ())),
            preferred_element_type=jnp.float32)
        d = (aa_r + aa_c) - 2.0 * cross
        return jnp.maximum(d, 1e-22)

    dis_P = sq_dist(x_r_ref[...], x_c_ref[...], xx_r_ref[...], xx_c_ref[...])
    dis_Q = sq_dist(z_r_ref[...], z_c_ref[...], zz_r_ref[...], zz_c_ref[...])

    # Diagonal entries forced to 1e-22 (tile-local iotas; the mask is all-false
    # on off-diagonal tiles, so this is a cheap no-op select there).
    row_g = i * tm + lax.broadcasted_iota(jnp.int32, (tm, tn), 0)
    col_g = j * tn + lax.broadcasted_iota(jnp.int32, (tm, tn), 1)
    diag = row_g == col_g
    dis_P = jnp.where(diag, 1e-22, dis_P)
    dis_Q = jnp.where(diag, 1e-22, dis_Q)

    def pij(dist, rho, inv_sigma, gamma2pi, v, p):
        d = jnp.maximum((dist - rho) * inv_sigma, 0.0)
        if p != 2.0:
            d = jnp.power(d, p * 0.5)
        if v == 1.0:
            # (1 + d)^-1 exactly -> one reciprocal instead of log+exp.
            return gamma2pi * pl.reciprocal(1.0 + d)
        # (1 + d/v)^(-(v+1)/2) = exp(-(v+1)/2 * log(1 + d/v))  (1 log + 1 exp)
        return gamma2pi * jnp.exp((-(v + 1.0) * 0.5) * jnp.log(1.0 + d * (1.0 / v)))

    # Data-space similarity: row-parameterized pij and its "transpose", which
    # is re-evaluated on the same symmetric dist tile with column params
    # (no (TM,TN) transpose, no (j,i) tile fetch).
    p_row = pij(dis_P, rho_r_ref[...], isig_r_ref[...], gamma2pi_in, v_in, 2.0)
    p_col = pij(dis_P, rho_c_ref[...], isig_c_ref[...], gamma2pi_in, v_in, 2.0)
    P = p_row + p_col - p_row * p_col

    # Latent-space similarity: scalar rho=0 / sigma=1 -> q already symmetric.
    q = pij(dis_Q, 0.0, 1.0, gamma2pi_lat, v_lat, pow_)
    Q = 2.0 * q - q * q

    # _TwowaydivergenceLoss partial sum for this tile.
    EPS = 1e-12
    l = P * jnp.log(Q + EPS) + (1.0 - P) * jnp.log(1.0 - Q + EPS)
    part_ref[...] += jnp.sum(l)

    disP_ref[...] = dis_P
    disQ_ref[...] = dis_Q
    P_ref[...] = P
    Q_ref[...] = Q


def my_loss_forward(input_data, latent_data, rho, sigma, *,
                    v_input=100.0, v_latent=1.0, pow_=2.0,
                    tile_m=256, tile_n=512):
    """Pallas equivalent of MyLoss(v_input, Similarity).forward(...)."""
    x = jnp.asarray(input_data, jnp.float32)
    z = jnp.asarray(latent_data, jnp.float32)
    N, D_in = x.shape
    _, D_lat = z.shape

    rho_r = jnp.asarray(rho, jnp.float32).reshape(N, 1)           # (N, 1)
    sig_r = jnp.asarray(sigma, jnp.float32).reshape(N, 1)
    isig_r = 1.0 / sig_r                                          # precomputed 1/sigma
    rho_c = rho_r.reshape(1, N)                                   # (1, N)
    isig_c = isig_r.reshape(1, N)

    # Precomputed squared row norms (drops the aa + aa.T transpose in-kernel).
    xx_r = jnp.sum(x * x, axis=1, keepdims=True)                  # (N, 1)
    zz_r = jnp.sum(z * z, axis=1, keepdims=True)
    xx_c = xx_r.reshape(1, N)
    zz_c = zz_r.reshape(1, N)

    tm = _pick_tile(N, 8, int(tile_m))      # sublane tile
    tn = _pick_tile(N, 128, int(tile_n))    # lane tile
    gm, gn = N // tm, N // tn

    gamma2pi_in = (float(_cal_gamma(float(v_input))) ** 2) * 2.0 * math.pi
    gamma2pi_lat = (float(_cal_gamma(float(v_latent))) ** 2) * 2.0 * math.pi

    kernel = functools.partial(
        _dmt_loss_kernel,
        gamma2pi_in=gamma2pi_in, v_in=float(v_input),
        gamma2pi_lat=gamma2pi_lat, v_lat=float(v_latent),
        pow_=float(pow_), tm=tm, tn=tn)

    row_spec = lambda d: pl.BlockSpec((tm, d), lambda i, j: (i, 0))
    col_spec = lambda d: pl.BlockSpec((tn, d), lambda i, j: (j, 0))
    rowvec_spec = pl.BlockSpec((tm, 1), lambda i, j: (i, 0))
    colvec_spec = pl.BlockSpec((1, tn), lambda i, j: (0, j))
    tile_spec = pl.BlockSpec((tm, tn), lambda i, j: (i, j))
    part_spec = pl.BlockSpec((8, 128), lambda i, j: (i, 0))

    out_shapes = (
        jax.ShapeDtypeStruct((gm * 8, 128), jnp.float32),   # per-row-block loss partials
        jax.ShapeDtypeStruct((N, N), jnp.float32),          # dis_P
        jax.ShapeDtypeStruct((N, N), jnp.float32),          # dis_Q
        jax.ShapeDtypeStruct((N, N), jnp.float32),          # P
        jax.ShapeDtypeStruct((N, N), jnp.float32),          # Q
    )

    tile_bytes = tm * tn * 4
    vmem_need = 20 * tile_bytes + 8 * (tm + tn) * (D_in + D_lat + 6)
    vmem_limit = int(min(max(2 * vmem_need, 32 * 1024 * 1024), 48 * 1024 * 1024))

    cost = pl.CostEstimate(
        flops=int(2 * N * N * (D_in + D_lat) + 40 * N * N),
        transcendentals=int(7 * N * N),
        bytes_accessed=int(4 * (4 * N * N + 2 * N * (D_in + D_lat) + 8 * N
                                + gm * 8 * 128)))

    grid_spec = pltpu.PrefetchScalarGridSpec(
        num_scalar_prefetch=0,
        grid=(gm, gn),
        in_specs=[row_spec(D_in), col_spec(D_in),
                  row_spec(D_lat), col_spec(D_lat),
                  rowvec_spec, colvec_spec,      # xx row / col
                  rowvec_spec, colvec_spec,      # zz row / col
                  rowvec_spec, colvec_spec,      # rho row / col
                  rowvec_spec, colvec_spec],     # 1/sigma row / col
        out_specs=(part_spec, tile_spec, tile_spec, tile_spec, tile_spec),
    )

    partials, dis_P, dis_Q, P, Q = pl.pallas_call(
        kernel,
        out_shape=out_shapes,
        grid_spec=grid_spec,
        compiler_params=pltpu.CompilerParams(
            dimension_semantics=("parallel", "arbitrary"),
            vmem_limit_bytes=vmem_limit),
        cost_estimate=cost,
    )(x, x, z, z, xx_r, xx_c, zz_r, zz_c, rho_r, rho_c, isig_r, isig_c)

    # Each (8,128) partial tile is filled with its row-block's summed loss.
    loss_ce = -jnp.sum(partials[::8, 0]) / jnp.float32(N * N)
    return loss_ce, dis_P, dis_Q, P, Q


def _reference(x, z, rho, sigma, v_input, v_latent, pow_):
    """Pure-JAX reference mirroring the PyTorch module (euclidean metric)."""
    N = x.shape[0]

    def dist2(a):
        aa = jnp.sum(a * a, axis=1, keepdims=True)
        d = aa + aa.T - 2.0 * (a @ a.T)
        d = jnp.maximum(d, 1e-22)
        return jnp.where(jnp.eye(N, dtype=bool), 1e-22, d)

    def sim(dist, rho_, sigma_, v, p):
        g = _cal_gamma(float(v))
        d = jnp.maximum((dist - rho_) / sigma_, 0.0)
        if float(p) != 2.0:
            d = d ** (float(p) / 2.0)
        pij = (g * g) * (1.0 + d / v) ** (-(v + 1.0) / 2.0) * (2.0 * math.pi)
        return pij + pij.T - pij * pij.T

    dis_P = dist2(x)
    dis_Q = dist2(z)
    P = sim(dis_P, rho.reshape(N, 1), sigma.reshape(N, 1), v_input, 2.0)
    Q = sim(dis_Q, 0.0, 1.0, v_latent, pow_)
    EPS = 1e-12
    loss = -jnp.mean(P * jnp.log(Q + EPS) + (1.0 - P) * jnp.log(1.0 - Q + EPS))
    return loss, dis_P, dis_Q, P, Q


if __name__ == "__main__":
    # Small deterministic example: N=16 samples, 32-d input, 8-d latent.
    key = jax.random.PRNGKey(0)
    k1, k2, k3, k4 = jax.random.split(key, 4)
    N, D_in, D_lat = 16, 32, 8

    input_data = jax.random.normal(k1, (N, D_in), dtype=jnp.float32)
    latent_data = jax.random.normal(k2, (N, D_lat), dtype=jnp.float32)
    rho = 0.1 * jax.random.uniform(k3, (N,), dtype=jnp.float32)
    sigma = 1.0 + 0.5 * jax.random.uniform(k4, (N,), dtype=jnp.float32)

    loss_ce, dis_P, dis_Q, P, Q = my_loss_forward(
        input_data, latent_data, rho, sigma,
        v_input=100.0, v_latent=1.0, pow_=2.0)
    jax.block_until_ready((loss_ce, dis_P, dis_Q, P, Q))

    # Correctness check against the pure-JAX reference.
    loss_r, dis_P_r, dis_Q_r, P_r, Q_r = _reference(
        input_data, latent_data, rho, sigma, 100.0, 1.0, 2.0)

    assert dis_P.shape == (N, N) and Q.shape == (N, N)
    assert bool(jnp.isfinite(loss_ce))
    assert bool(jnp.allclose(dis_P, dis_P_r, rtol=1e-3, atol=1e-3))
    assert bool(jnp.allclose(dis_Q, dis_Q_r, rtol=1e-3, atol=1e-3))
    assert bool(jnp.allclose(P, P_r, rtol=1e-3, atol=1e-4))
    assert bool(jnp.allclose(Q, Q_r, rtol=1e-3, atol=1e-4))
    assert bool(jnp.allclose(loss_ce, loss_r, rtol=1e-3, atol=1e-4))

    print("KERNEL_OK")
</pallas_src>

<mosaic_0001>
module attributes {stable_mosaic.version = 11 : i64} {
  func.func @_dmt_loss_kernel(%arg0: i32, %arg1: i32, %arg2: memref<16x32xf32, #tpu.memory_space<vmem>>, %arg3: memref<16x32xf32, #tpu.memory_space<vmem>>, %arg4: memref<16x8xf32, #tpu.memory_space<vmem>>, %arg5: memref<16x8xf32, #tpu.memory_space<vmem>>, %arg6: memref<16x1xf32, #tpu.memory_space<vmem>>, %arg7: memref<1x16xf32, #tpu.memory_space<vmem>>, %arg8: memref<16x1xf32, #tpu.memory_space<vmem>>, %arg9: memref<1x16xf32, #tpu.memory_space<vmem>>, %arg10: memref<16x1xf32, #tpu.memory_space<vmem>>, %arg11: memref<1x16xf32, #tpu.memory_space<vmem>>, %arg12: memref<16x1xf32, #tpu.memory_space<vmem>>, %arg13: memref<1x16xf32, #tpu.memory_space<vmem>>, %arg14: memref<8x128xf32, #tpu.memory_space<vmem>>, %arg15: memref<16x16xf32, #tpu.memory_space<vmem>>, %arg16: memref<16x16xf32, #tpu.memory_space<vmem>>, %arg17: memref<16x16xf32, #tpu.memory_space<vmem>>, %arg18: memref<16x16xf32, #tpu.memory_space<vmem>>) attributes {dimension_semantics = [#tpu.dimension_semantics<parallel>, #tpu.dimension_semantics<arbitrary>], iteration_bounds = array<i64: 1, 1>, scalar_prefetch = 0 : i64, scratch_operands = 0 : i64, tpu.core_type = #tpu.core_type<tc>, window_params = [{transform_indices = @transform_0, window_bounds = array<i64: 16, 32>}, {transform_indices = @transform_1, window_bounds = array<i64: 16, 32>}, {transform_indices = @transform_2, window_bounds = array<i64: 16, 8>}, {transform_indices = @transform_3, window_bounds = array<i64: 16, 8>}, {transform_indices = @transform_4, window_bounds = array<i64: 16, 1>}, {transform_indices = @transform_5, window_bounds = array<i64: 1, 16>}, {transform_indices = @transform_6, window_bounds = array<i64: 16, 1>}, {transform_indices = @transform_7, window_bounds = array<i64: 1, 16>}, {transform_indices = @transform_8, window_bounds = array<i64: 16, 1>}, {transform_indices = @transform_9, window_bounds = array<i64: 1, 16>}, {transform_indices = @transform_10, window_bounds = array<i64: 16, 1>}, {transform_indices = @transform_11, window_bounds = array<i64: 1, 16>}, {transform_indices = @transform_12, window_bounds = array<i64: 8, 128>}, {transform_indices = @transform_13, window_bounds = array<i64: 16, 16>}, {transform_indices = @transform_14, window_bounds = array<i64: 16, 16>}, {transform_indices = @transform_15, window_bounds = array<i64: 16, 16>}, {transform_indices = @transform_16, window_bounds = array<i64: 16, 16>}]} {
    %c0_i32 = arith.constant 0 : i32
    %0 = arith.cmpi eq, %arg1, %c0_i32 : i32
    %1 = arith.extui %0 : i1 to i32
    %c0_i32_0 = arith.constant 0 : i32
    %2 = arith.cmpi ne, %1, %c0_i32_0 : i32
    scf.if %2 {
      %cst_65 = arith.constant 0.000000e+00 : f32
      %121 = vector.broadcast %cst_65 : f32 to vector<8x128xf32>
      %c0_66 = arith.constant 0 : index
      %c0_67 = arith.constant 0 : index
      %122 = vector.load %arg14[%c0_66, %c0_67] : memref<8x128xf32, #tpu.memory_space<vmem>>, vector<8x128xf32>
      tpu.vector_store %arg14[%c0_66, %c0_67], %121 {strides = array<i32>} : memref<8x128xf32, #tpu.memory_space<vmem>>, vector<8x128xf32>,
    } else {
    }
    %c0 = arith.constant 0 : index
    %c0_1 = arith.constant 0 : index
    %3 = vector.load %arg2[%c0, %c0_1] : memref<16x32xf32, #tpu.memory_space<vmem>>, vector<16x32xf32>
    %c0_2 = arith.constant 0 : index
    %c0_3 = arith.constant 0 : index
    %4 = vector.load %arg3[%c0_2, %c0_3] : memref<16x32xf32, #tpu.memory_space<vmem>>, vector<16x32xf32>
    %c0_4 = arith.constant 0 : index
    %c0_5 = arith.constant 0 : index
    %5 = vector.load %arg6[%c0_4, %c0_5] : memref<16x1xf32, #tpu.memory_space<vmem>>, vector<16x1xf32>
    %c0_6 = arith.constant 0 : index
    %c0_7 = arith.constant 0 : index
    %6 = vector.load %arg7[%c0_6, %c0_7] : memref<1x16xf32, #tpu.memory_space<vmem>>, vector<1x16xf32>
    %cst = arith.constant dense<0.000000e+00> : vector<16x16xf32>
    %7 = tpu.matmul %3, %4, %cst {dimension_numbers = #tpu.dot_dimension_numbers<[1], [1], [0], [0], [0, 0, 1, 0], [], []>} : vector<16x32xf32>, vector<16x32xf32>, vector<16x16xf32> -> vector<16x16xf32>
    %8 = vector.broadcast %5 : vector<16x1xf32> to vector<16x16xf32>
    %9 = vector.broadcast %6 : vector<1x16xf32> to vector<16x16xf32>
    %10 = arith.addf %8, %9 : vector<16x16xf32>
    %cst_8 = arith.constant 2.000000e+00 : f32
    %11 = vector.broadcast %cst_8 : f32 to vector<16x16xf32>
    %12 = arith.mulf %11, %7 : vector<16x16xf32>
    %13 = arith.subf %10, %12 : vector<16x16xf32>
    %cst_9 = arith.constant 1.000000e-22 : f32
    %14 = vector.broadcast %cst_9 : f32 to vector<16x16xf32>
    %15 = arith.maximumf %13, %14 : vector<16x16xf32>
    %c0_10 = arith.constant 0 : index
    %c0_11 = arith.constant 0 : index
    %16 = vector.load %arg4[%c0_10, %c0_11] : memref<16x8xf32, #tpu.memory_space<vmem>>, vector<16x8xf32>
    %c0_12 = arith.constant 0 : index
    %c0_13 = arith.constant 0 : index
    %17 = vector.load %arg5[%c0_12, %c0_13] : memref<16x8xf32, #tpu.memory_space<vmem>>, vector<16x8xf32>
    %c0_14 = arith.constant 0 : index
    %c0_15 = arith.constant 0 : index
    %18 = vector.load %arg8[%c0_14, %c0_15] : memref<16x1xf32, #tpu.memory_space<vmem>>, vector<16x1xf32>
    %c0_16 = arith.constant 0 : index
    %c0_17 = arith.constant 0 : index
    %19 = vector.load %arg9[%c0_16, %c0_17] : memref<1x16xf32, #tpu.memory_space<vmem>>, vector<1x16xf32>
    %cst_18 = arith.constant dense<0.000000e+00> : vector<16x16xf32>
    %20 = tpu.matmul %16, %17, %cst_18 {dimension_numbers = #tpu.dot_dimension_numbers<[1], [1], [0], [0], [0, 0, 1, 0], [], []>} : vector<16x8xf32>, vector<16x8xf32>, vector<16x16xf32> -> vector<16x16xf32>
    %21 = vector.broadcast %18 : vector<16x1xf32> to vector<16x16xf32>
    %22 = vector.broadcast %19 : vector<1x16xf32> to vector<16x16xf32>
    %23 = arith.addf %21, %22 : vector<16x16xf32>
    %cst_19 = arith.constant 2.000000e+00 : f32
    %24 = vector.broadcast %cst_19 : f32 to vector<16x16xf32>
    %25 = arith.mulf %24, %20 : vector<16x16xf32>
    %26 = arith.subf %23, %25 : vector<16x16xf32>
    %cst_20 = arith.constant 1.000000e-22 : f32
    %27 = vector.broadcast %cst_20 : f32 to vector<16x16xf32>
    %28 = arith.maximumf %26, %27 : vector<16x16xf32>
    %c16_i32 = arith.constant 16 : i32
    %29 = arith.muli %arg0, %c16_i32 : i32
    %30 = tpu.iota {dimensions = array<i32: 0>} : vector<16x16xi32>
    %31 = vector.broadcast %29 : i32 to vector<16x16xi32>
    %32 = arith.addi %31, %30 : vector<16x16xi32>
    %c16_i32_21 = arith.constant 16 : i32
    %33 = arith.muli %arg1, %c16_i32_21 : i32
    %34 = tpu.iota {dimensions = array<i32: 1>} : vector<16x16xi32>
    %35 = vector.broadcast %33 : i32 to vector<16x16xi32>
    %36 = arith.addi %35, %34 : vector<16x16xi32>
    %37 = arith.cmpi eq, %32, %36 : vector<16x16xi32>
    %cst_22 = arith.constant 1.000000e-22 : f32
    %38 = vector.broadcast %cst_22 : f32 to vector<16x16xf32>
    %39 = arith.select %37, %38, %15 : vector<16x16xi1>, vector<16x16xf32>
    %cst_23 = arith.constant 1.000000e-22 : f32
    %40 = vector.broadcast %cst_23 : f32 to vector<16x16xf32>
    %41 = arith.select %37, %40, %28 : vector<16x16xi1>, vector<16x16xf32>
    %c0_24 = arith.constant 0 : index
    %c0_25 = arith.constant 0 : index
    %42 = vector.load %arg10[%c0_24, %c0_25] : memref<16x1xf32, #tpu.memory_space<vmem>>, vector<16x1xf32>
    %c0_26 = arith.constant 0 : index
    %c0_27 = arith.constant 0 : index
    %43 = vector.load %arg12[%c0_26, %c0_27] : memref<16x1xf32, #tpu.memory_space<vmem>>, vector<16x1xf32>
    %44 = vector.broadcast %42 : vector<16x1xf32> to vector<16x16xf32>
    %45 = arith.subf %39, %44 : vector<16x16xf32>
    %46 = vector.broadcast %43 : vector<16x1xf32> to vector<16x16xf32>
    %47 = arith.mulf %45, %46 : vector<16x16xf32>
    %cst_28 = arith.constant 0.000000e+00 : f32
    %48 = vector.broadcast %cst_28 : f32 to vector<16x16xf32>
    %49 = arith.maximumf %47, %48 : vector<16x16xf32>
    %cst_29 = arith.constant 0.00999999977 : f32
    %50 = vector.broadcast %cst_29 : f32 to vector<16x16xf32>
    %51 = arith.mulf %49, %50 : vector<16x16xf32>
    %cst_30 = arith.constant 1.000000e+00 : f32
    %52 = vector.broadcast %cst_30 : f32 to vector<16x16xf32>
    %53 = arith.addf %52, %51 : vector<16x16xf32>
    %54 = math.log %53 : vector<16x16xf32>
    %cst_31 = arith.constant -5.050000e+01 : f32
    %55 = vector.broadcast %cst_31 : f32 to vector<16x16xf32>
    %56 = arith.mulf %55, %54 : vector<16x16xf32>
    %57 = math.exp %56 : vector<16x16xf32>
    %cst_32 = arith.constant 0.995012581 : f32
    %58 = vector.broadcast %cst_32 : f32 to vector<16x16xf32>
    %59 = arith.mulf %58, %57 : vector<16x16xf32>
    %c0_33 = arith.constant 0 : index
    %c0_34 = arith.constant 0 : index
    %60 = vector.load %arg11[%c0_33, %c0_34] : memref<1x16xf32, #tpu.memory_space<vmem>>, vector<1x16xf32>
    %c0_35 = arith.constant 0 : index
    %c0_36 = arith.constant 0 : index
    %61 = vector.load %arg13[%c0_35, %c0_36] : memref<1x16xf32, #tpu.memory_space<vmem>>, vector<1x16xf32>
    %62 = vector.broadcast %60 : vector<1x16xf32> to vector<16x16xf32>
    %63 = arith.subf %39, %62 : vector<16x16xf32>
    %64 = vector.broadcast %61 : vector<1x16xf32> to vector<16x16xf32>
    %65 = arith.mulf %63, %64 : vector<16x16xf32>
    %cst_37 = arith.constant 0.000000e+00 : f32
    %66 = vector.broadcast %cst_37 : f32 to vector<16x16xf32>
    %67 = arith.maximumf %65, %66 : vector<16x16xf32>
    %cst_38 = arith.constant 0.00999999977 : f32
    %68 = vector.broadcast %cst_38 : f32 to vector<16x16xf32>
    %69 = arith.mulf %67, %68 : vector<16x16xf32>
    %cst_39 = arith.constant 1.000000e+00 : f32
    %70 = vector.broadcast %cst_39 : f32 to vector<16x16xf32>
    %71 = arith.addf %70, %69 : vector<16x16xf32>
    %72 = math.log %71 : vector<16x16xf32>
    %cst_40 = arith.constant -5.050000e+01 : f32
    %73 = vector.broadcast %cst_40 : f32 to vector<16x16xf32>
    %74 = arith.mulf %73, %72 : vector<16x16xf32>
    %75 = math.exp %74 : vector<16x16xf32>
    %cst_41 = arith.constant 0.995012581 : f32
    %76 = vector.broadcast %cst_41 : f32 to vector<16x16xf32>
    %77 = arith.mulf %76, %75 : vector<16x16xf32>
    %78 = arith.addf %59, %77 : vector<16x16xf32>
    %79 = arith.mulf %59, %77 : vector<16x16xf32>
    %80 = arith.subf %78, %79 : vector<16x16xf32>
    %cst_42 = arith.constant 0.000000e+00 : f32
    %81 = vector.broadcast %cst_42 : f32 to vector<16x16xf32>
    %82 = arith.subf %41, %81 : vector<16x16xf32>
    %cst_43 = arith.constant 1.000000e+00 : f32
    %83 = vector.broadcast %cst_43 : f32 to vector<16x16xf32>
    %84 = arith.mulf %82, %83 : vector<16x16xf32>
    %cst_44 = arith.constant 0.000000e+00 : f32
    %85 = vector.broadcast %cst_44 : f32 to vector<16x16xf32>
    %86 = arith.maximumf %84, %85 : vector<16x16xf32>
    %cst_45 = arith.constant 1.000000e+00 : f32
    %87 = vector.broadcast %cst_45 : f32 to vector<16x16xf32>
    %88 = arith.addf %87, %86 : vector<16x16xf32>
    %89 = tpu.reciprocal %88 : vector<16x16xf32> -> vector<16x16xf32>
    %cst_46 = arith.constant 0.636619746 : f32
    %90 = vector.broadcast %cst_46 : f32 to vector<16x16xf32>
    %91 = arith.mulf %90, %89 : vector<16x16xf32>
    %cst_47 = arith.constant 2.000000e+00 : f32
    %92 = vector.broadcast %cst_47 : f32 to vector<16x16xf32>
    %93 = arith.mulf %92, %91 : vector<16x16xf32>
    %94 = arith.mulf %91, %91 : vector<16x16xf32>
    %95 = arith.subf %93, %94 : vector<16x16xf32>
    %cst_48 = arith.constant 9.99999996E-13 : f32
    %96 = vector.broadcast %cst_48 : f32 to vector<16x16xf32>
    %97 = arith.addf %95, %96 : vector<16x16xf32>
    %98 = math.log %97 : vector<16x16xf32>
    %99 = arith.mulf %80, %98 : vector<16x16xf32>
    %cst_49 = arith.constant 1.000000e+00 : f32
    %100 = vector.broadcast %cst_49 : f32 to vector<16x16xf32>
    %101 = arith.subf %100, %80 : vector<16x16xf32>
    %cst_50 = arith.constant 1.000000e+00 : f32
    %102 = vector.broadcast %cst_50 : f32 to vector<16x16xf32>
    %103 = arith.subf %102, %95 : vector<16x16xf32>
    %cst_51 = arith.constant 9.99999996E-13 : f32
    %104 = vector.broadcast %cst_51 : f32 to vector<16x16xf32>
    %105 = arith.addf %103, %104 : vector<16x16xf32>
    %106 = math.log %105 : vector<16x16xf32>
    %107 = arith.mulf %101, %106 : vector<16x16xf32>
    %108 = arith.addf %99, %107 : vector<16x16xf32>
    %c0_52 = arith.constant 0 : index
    %c0_53 = arith.constant 0 : index
    %109 = vector.load %arg14[%c0_52, %c0_53] : memref<8x128xf32, #tpu.memory_space<vmem>>, vector<8x128xf32>
    %110 = vector.shape_cast %108 : vector<16x16xf32> to vector<1x16x16xf32>
    %cst_54 = arith.constant dense<0.000000e+00> : vector<1xf32>
    %111 = vector.multi_reduction <add>, %110, %cst_54 [1, 2] : vector<1x16x16xf32> to vector<1xf32>
    %112 = vector.shape_cast %111 : vector<1xf32> to vector<1x1x1xf32>
    %113 = vector.extract %112[0, 0, 0] : f32 from vector<1x1x1xf32>
    %114 = vector.broadcast %113 : f32 to vector<8x128xf32>
    %115 = arith.addf %109, %114 : vector<8x128xf32>
    %c0_55 = arith.constant 0 : index
    %c0_56 = arith.constant 0 : index
    %116 = vector.load %arg14[%c0_55, %c0_56] : memref<8x128xf32, #tpu.memory_space<vmem>>, vector<8x128xf32>
    tpu.vector_store %arg14[%c0_55, %c0_56], %115 {strides = array<i32>} : memref<8x128xf32, #tpu.memory_space<vmem>>, vector<8x128xf32>,
    %c0_57 = arith.constant 0 : index
    %c0_58 = arith.constant 0 : index
    %117 = vector.load %arg15[%c0_57, %c0_58] : memref<16x16xf32, #tpu.memory_space<vmem>>, vector<16x16xf32>
    tpu.vector_store %arg15[%c0_57, %c0_58], %39 {strides = array<i32>} : memref<16x16xf32, #tpu.memory_space<vmem>>, vector<16x16xf32>,
    %c0_59 = arith.constant 0 : index
    %c0_60 = arith.constant 0 : index
    %118 = vector.load %arg16[%c0_59, %c0_60] : memref<16x16xf32, #tpu.memory_space<vmem>>, vector<16x16xf32>
    tpu.vector_store %arg16[%c0_59, %c0_60], %41 {strides = array<i32>} : memref<16x16xf32, #tpu.memory_space<vmem>>, vector<16x16xf32>,
    %c0_61 = arith.constant 0 : index
    %c0_62 = arith.constant 0 : index
    %119 = vector.load %arg17[%c0_61, %c0_62] : memref<16x16xf32, #tpu.memory_space<vmem>>, vector<16x16xf32>
    tpu.vector_store %arg17[%c0_61, %c0_62], %80 {strides = array<i32>} : memref<16x16xf32, #tpu.memory_space<vmem>>, vector<16x16xf32>,
    %c0_63 = arith.constant 0 : index
    %c0_64 = arith.constant 0 : index
    %120 = vector.load %arg18[%c0_63, %c0_64] : memref<16x16xf32, #tpu.memory_space<vmem>>, vector<16x16xf32>
    tpu.vector_store %arg18[%c0_63, %c0_64], %95 {strides = array<i32>} : memref<16x16xf32, #tpu.memory_space<vmem>>, vector<16x16xf32>,
    return
  }
  func.func @transform_0(%arg0: i32, %arg1: i32) -> (i32, i32) {
    %c0_i32 = arith.constant 0 : i32
    %c0_i32_0 = arith.constant 0 : i32
    return %arg0, %c0_i32 : i32, i32
  }
  func.func @transform_1(%arg0: i32, %arg1: i32) -> (i32, i32) {
    %c0_i32 = arith.constant 0 : i32
    %c0_i32_0 = arith.constant 0 : i32
    return %arg1, %c0_i32 : i32, i32
  }
  func.func @transform_2(%arg0: i32, %arg1: i32) -> (i32, i32) {
    %c0_i32 = arith.constant 0 : i32
    %c0_i32_0 = arith.constant 0 : i32
    return %arg0, %c0_i32 : i32, i32
  }
  func.func @transform_3(%arg0: i32, %arg1: i32) -> (i32, i32) {
    %c0_i32 = arith.constant 0 : i32
    %c0_i32_0 = arith.constant 0 : i32
    return %arg1, %c0_i32 : i32, i32
  }
  func.func @transform_4(%arg0: i32, %arg1: i32) -> (i32, i32) {
    %c0_i32 = arith.constant 0 : i32
    %c0_i32_0 = arith.constant 0 : i32
    return %arg0, %c0_i32 : i32, i32
  }
  func.func @transform_5(%arg0: i32, %arg1: i32) -> (i32, i32) {
    %c0_i32 = arith.constant 0 : i32
    %c0_i32_0 = arith.constant 0 : i32
    return %c0_i32, %arg1 : i32, i32
  }
  func.func @transform_6(%arg0: i32, %arg1: i32) -> (i32, i32) {
    %c0_i32 = arith.constant 0 : i32
    %c0_i32_0 = arith.constant 0 : i32
    return %arg0, %c0_i32 : i32, i32
  }
  func.func @transform_7(%arg0: i32, %arg1: i32) -> (i32, i32) {
    %c0_i32 = arith.constant 0 : i32
    %c0_i32_0 = arith.constant 0 : i32
    return %c0_i32, %arg1 : i32, i32
  }
  func.func @transform_8(%arg0: i32, %arg1: i32) -> (i32, i32) {
    %c0_i32 = arith.constant 0 : i32
    %c0_i32_0 = arith.constant 0 : i32
    return %arg0, %c0_i32 : i32, i32
  }
  func.func @transform_9(%arg0: i32, %arg1: i32) -> (i32, i32) {
    %c0_i32 = arith.constant 0 : i32
    %c0_i32_0 = arith.constant 0 : i32
    return %c0_i32, %arg1 : i32, i32
  }
  func.func @transform_10(%arg0: i32, %arg1: i32) -> (i32, i32) {
    %c0_i32 = arith.constant 0 : i32
    %c0_i32_0 = arith.constant 0 : i32
    return %arg0, %c0_i32 : i32, i32
  }
  func.func @transform_11(%arg0: i32, %arg1: i32) -> (i32, i32) {
    %c0_i32 = arith.constant 0 : i32
    %c0_i32_0 = arith.constant 0 : i32
    return %c0_i32, %arg1 : i32, i32
  }
  func.func @transform_12(%arg0: i32, %arg1: i32) -> (i32, i32) {
    %c0_i32 = arith.constant 0 : i32
    %c0_i32_0 = arith.constant 0 : i32
    return %arg0, %c0_i32 : i32, i32
  }
  func.func @transform_13(%arg0: i32, %arg1: i32) -> (i32, i32) {
    %c0_i32 = arith.constant 0 : i32
    return %arg0, %arg1 : i32, i32
  }
  func.func @transform_14(%arg0: i32, %arg1: i32) -> (i32, i32) {
    %c0_i32 = arith.constant 0 : i32
    return %arg0, %arg1 : i32, i32
  }
  func.func @transform_15(%arg0: i32, %arg1: i32) -> (i32, i32) {
    %c0_i32 = arith.constant 0 : i32
    return %arg0, %arg1 : i32, i32
  }
  func.func @transform_16(%arg0: i32, %arg1: i32) -> (i32, i32) {
    %c0_i32 = arith.constant 0 : i32
    return %arg0, %arg1 : i32, i32
  }
}

</mosaic_0001>

<llo_original>
// kernel: tpu_custom_call.1
$region0: #{tpu_custom_call.1}
  #allocation0 [shape = 'u32[]', space=smem, size = 0x4, offset = 0x4, fixed_abs, tag = 'smem constant byte address 0x4 - core index']
  #allocation1 [shape = 'u32[144,128]{1,0:T(1,128)}', space=vmem, size = 0x12000, scoped, tag = 'internal scratch']
  %s0 = inlined_call_operand.vmem [shape: f32[16,32], index: 0, kind: input, shape index: {}]
  %s1 = inlined_call_operand.vmem [shape: f32[16,32], index: 1, kind: input, shape index: {}]
  %s2 = inlined_call_operand.vmem [shape: f32[16,8], index: 2, kind: input, shape index: {}]
  %s3 = inlined_call_operand.vmem [shape: f32[16,8], index: 3, kind: input, shape index: {}]
  %s4 = inlined_call_operand.vmem [shape: f32[16,1], index: 4, kind: input, shape index: {}]
  %s5 = inlined_call_operand.vmem [shape: f32[1,16], index: 5, kind: input, shape index: {}]
  %s6 = inlined_call_operand.vmem [shape: f32[16,1], index: 6, kind: input, shape index: {}]
  %s7 = inlined_call_operand.vmem [shape: f32[1,16], index: 7, kind: input, shape index: {}]
  %s8 = inlined_call_operand.vmem [shape: f32[16,1], index: 8, kind: input, shape index: {}]
  %s9 = inlined_call_operand.vmem [shape: f32[1,16], index: 9, kind: input, shape index: {}]
  %s10 = inlined_call_operand.vmem [shape: f32[16,1], index: 10, kind: input, shape index: {}]
  %s11 = inlined_call_operand.vmem [shape: f32[1,16], index: 11, kind: input, shape index: {}]
  %s12 = inlined_call_operand.hbm [shape: f32[8,128], index: 12, kind: output, shape index: {0}]
  %s13 = inlined_call_operand.hbm [shape: f32[16,16], index: 13, kind: output, shape index: {1}]
  %s14 = inlined_call_operand.hbm [shape: f32[16,16], index: 14, kind: output, shape index: {2}]
  %s15 = inlined_call_operand.hbm [shape: f32[16,16], index: 15, kind: output, shape index: {3}]
  %s16 = inlined_call_operand.hbm [shape: f32[16,16], index: 16, kind: output, shape index: {4}]
  %17 = xla_tuple %s12, %s13, %s14, %s15, %s16
  %s18 = sld [smem:[#allocation0]]
  $region94: #{tpu_custom_call.1} parent=0
    _
  %s20 = ssub.s32 1, %s18
  %s21 = scalar_select 0, %s20, %s18
  $region1: #{tpu_custom_call.1} parent=0
    #allocation2 [shape = 'u8[4096]{0}', space=vmem, size = 0x1000, scoped, tag = 'output window, operand 0, single buffered']
    #allocation3 [shape = 's32[1]{0}', space=sflag, size = 0x4, scoped, tag = 'scoped memory for tpu_custom_call.1']
    #allocation4 [shape = 'u8[8192]{0}', space=vmem, size = 0x2000, scoped, tag = 'output window, operand 1, single buffered']
    #allocation5 [shape = 's32[1]{0}', space=sflag, size = 0x4, scoped, tag = 'scoped memory for tpu_custom_call.1']
    #allocation6 [shape = 'u8[8192]{0}', space=vmem, size = 0x2000, scoped, tag = 'output window, operand 2, single buffered']
    #allocation7 [shape = 'u8[8192]{0}', space=vmem, size = 0x2000, scoped, tag = 'output window, operand 3, single buffered']
    #allocation8 [shape = 's32[1]{0}', space=sflag, size = 0x4, scoped, tag = 'scoped memory for tpu_custom_call.1']
    #allocation9 [shape = 'u8[8192]{0}', space=vmem, size = 0x2000, scoped, tag = 'output window, operand 4, single buffered']
    %22 = vsyncpa [#allocation3], 0
    %23 = vsyncpa [#allocation5], 0
    %24 = vsyncpa [#allocation8], 0
    // Predicated region
    $region2: #{tpu_custom_call.1} parent=1 // pred_check
      _
    $region3: #{tpu_custom_call.1} parent=1 // pred_check_branch
      %26 = sbr.rel (0) target = $region5
    $region4: #{tpu_custom_call.1} parent=1 // pred_region
      _
    $region5: #{tpu_custom_call.1} parent=1 // pred_fallthru
      _
    // Predicated region
    $region6: #{tpu_custom_call.1} parent=1 // pred_check
      _
    $region7: #{tpu_custom_call.1} parent=1 // pred_check_branch
      %28 = sbr.rel (0) target = $region9
    $region8: #{tpu_custom_call.1} parent=1 // pred_region
      _
    $region9: #{tpu_custom_call.1} parent=1 // pred_fallthru
      _
    // Predicated region
    $region10: #{tpu_custom_call.1} parent=1 // pred_check
      _
    $region11: #{tpu_custom_call.1} parent=1 // pred_check_branch
      %30 = sbr.rel (0) target = $region13
    $region12: #{tpu_custom_call.1} parent=1 // pred_region
      _
    $region13: #{tpu_custom_call.1} parent=1 // pred_fallthru
      _
    // Predicated region
    $region14: #{tpu_custom_call.1} parent=1 // pred_check
      _
    $region15: #{tpu_custom_call.1} parent=1 // pred_check_branch
      %32 = sbr.rel (0) target = $region17
    $region16: #{tpu_custom_call.1} parent=1 // pred_region
      _
    $region17: #{tpu_custom_call.1} parent=1 // pred_fallthru
      _
    // Predicated region
    $region18: #{tpu_custom_call.1} parent=1 // pred_check
      _
    $region19: #{tpu_custom_call.1} parent=1 // pred_check_branch
      %34 = sbr.rel (0) target = $region21
    $region20: #{tpu_custom_call.1} parent=1 // pred_region
      _
    $region21: #{tpu_custom_call.1} parent=1 // pred_fallthru
      _
    // Predicated region
    $region22: #{tpu_custom_call.1} parent=1 // pred_check
      _
    $region23: #{tpu_custom_call.1} parent=1 // pred_check_branch
      %36 = sbr.rel (0) target = $region25
    $region24: #{tpu_custom_call.1} parent=1 // pred_region
      _
    $region25: #{tpu_custom_call.1} parent=1 // pred_fallthru
      _
    // Predicated region
    $region26: #{tpu_custom_call.1} parent=1 // pred_check
      _
    $region27: #{tpu_custom_call.1} parent=1 // pred_check_branch
      %38 = sbr.rel (0) target = $region29
    $region28: #{tpu_custom_call.1} parent=1 // pred_region
      _
    $region29: #{tpu_custom_call.1} parent=1 // pred_fallthru
      _
    // Predicated region
    $region30: #{tpu_custom_call.1} parent=1 // pred_check
      _
    $region31: #{tpu_custom_call.1} parent=1 // pred_check_branch
      %40 = sbr.rel (0) target = $region33
    $region32: #{tpu_custom_call.1} parent=1 // pred_region
      _
    $region33: #{tpu_custom_call.1} parent=1 // pred_fallthru
      _
    // Predicated region
    $region34: #{tpu_custom_call.1} parent=1 // pred_check
      _
    $region35: #{tpu_custom_call.1} parent=1 // pred_check_branch
      %42 = sbr.rel (0) target = $region37
    $region36: #{tpu_custom_call.1} parent=1 // pred_region
      _
    $region37: #{tpu_custom_call.1} parent=1 // pred_fallthru
      _
    // Predicated region
    $region38: #{tpu_custom_call.1} parent=1 // pred_check
      _
    $region39: #{tpu_custom_call.1} parent=1 // pred_check_branch
      %44 = sbr.rel (0) target = $region41
    $region40: #{tpu_custom_call.1} parent=1 // pred_region
      _
    $region41: #{tpu_custom_call.1} parent=1 // pred_fallthru
      _
    // Predicated region
    $region42: #{tpu_custom_call.1} parent=1 // pred_check
      _
    $region43: #{tpu_custom_call.1} parent=1 // pred_check_branch
      %46 = sbr.rel (0) target = $region45
    $region44: #{tpu_custom_call.1} parent=1 // pred_region
      _
    $region45: #{tpu_custom_call.1} parent=1 // pred_fallthru
      _
    // Predicated region
    $region46: #{tpu_custom_call.1} parent=1 // pred_check
      _
    $region47: #{tpu_custom_call.1} parent=1 // pred_check_branch
      %48 = sbr.rel (0) target = $region49
    $region48: #{tpu_custom_call.1} parent=1 // pred_region
      _
    $region49: #{tpu_custom_call.1} parent=1 // pred_fallthru
      _
    %p49 = scmp.eq.s32.totalorder 0, 0
    // Predicated region
    $region50: #{tpu_custom_call.1} parent=1 // pred_check
      %p50 = pneg %p49
    $region51: #{tpu_custom_call.1} parent=1 // pred_check_branch
      %52 = sbr.rel (%p50) target = $region53
    $region52: #{tpu_custom_call.1} parent=1 // pred_region
      %53 = vst [vmem:[#allocation2] sm:$0xff] 0.0
    $region53: #{tpu_custom_call.1} parent=1 // pred_fallthru
      _
    %v54 = vld [vmem:[%s0] sm:$0xff]
    %v55 = vld [vmem:[%s0 + $0x8] sm:$0xff]
    %v56 = vld [vmem:[%s1] sm:$0xff]
    %v57 = vld [vmem:[%s1 + $0x8] sm:$0xff]
    %v58 = vld [vmem:[%s4] sm:$0xff]
    %v59 = vld [vmem:[%s4 + $0x8] sm:$0xff]
    %v60 = vld [vmem:[%s5] sm:$0x1]
    %vm61 = vcmask 261120
    %v63 = vsel %vm61, %v54, 0
    %v66 = vsel %vm61, %v55, 0
    %v69 = vsel %vm61, %v56, 0
    %v72 = vsel %vm61, %v57, 0
    %74 = vmatprep.subr.mxu0 0.0
    %75 = vmatpush1.xpose.msra.mxu0 %v69
    %76 = vmatprep.subr.mxu0 0.0
    %77 = vmatpush1.xpose.msra.mxu0 %v72
    %78 = vmatprep.subr.mxu0 0.0
    %79 = vmatpush1.xpose.msra.mxu0 0.0
    %80 = vmatprep.subr.mxu0 0.0
    %81 = vmatpush1.xpose.msra.mxu0 0.0
    %82 = vmatprep.subr.mxu0 0.0
    %83 = vmatpush1.xpose.msra.mxu0 0.0
    %84 = vmatprep.subr.mxu0 0.0
    %85 = vmatpush1.xpose.msra.mxu0 0.0
    %86 = vmatprep.subr.mxu0 0.0
    %87 = vmatpush1.xpose.msra.mxu0 0.0
    %88 = vmatprep.subr.mxu0 0.0
    %89 = vmatpush1.xpose.msra.mxu0 0.0
    %90 = vmatprep.subr.mxu0 0.0
    %91 = vmatpush1.xpose.msra.mxu0 0.0
    %92 = vmatprep.subr.mxu0 0.0
    %93 = vmatpush1.xpose.msra.mxu0 0.0
    %94 = vmatprep.subr.mxu0 0.0
    %95 = vmatpush1.xpose.msra.mxu0 0.0
    %96 = vmatprep.subr.mxu0 0.0
    %97 = vmatpush1.xpose.msra.mxu0 0.0
    %98 = vmatprep.subr.mxu0 0.0
    %99 = vmatpush1.xpose.msra.mxu0 0.0
    %100 = vmatprep.subr.mxu0 0.0
    %101 = vmatpush1.xpose.msra.mxu0 0.0
    %102 = vmatprep.subr.mxu0 0.0
    %103 = vmatpush1.xpose.msra.mxu0 0.0
    %104 = vmatprep.subr.mxu0 0.0
    %105 = vmatpush1.xpose.msra.mxu0 0.0
    %106 = vmatprep.subr.mxu0 0.0
    %107 = vmatpush1.xpose.msra.mxu0 0.0
    %108 = vmatprep.subr.mxu0 0.0
    %109 = vmatpush1.xpose.msra.mxu0 0.0
    %110 = vmatprep.subr.mxu0 0.0
    %111 = vmatpush1.xpose.msra.mxu0 0.0
    %112 = vmatprep.subr.mxu0 0.0
    %113 = vmatpush1.xpose.msra.mxu0 0.0
    %114 = vmatprep.subr.mxu0 0.0
    %115 = vmatpush1.xpose.msra.mxu0 0.0
    %116 = vmatprep.subr.mxu0 0.0
    %117 = vmatpush1.xpose.msra.mxu0 0.0
    %118 = vmatprep.subr.mxu0 0.0
    %119 = vmatpush1.xpose.msra.mxu0 0.0
    %120 = vmatprep.subr.mxu0 0.0
    %121 = vmatpush1.xpose.msra.mxu0 0.0
    %122 = vmatprep.subr.mxu0 0.0
    %123 = vmatpush1.xpose.msra.mxu0 0.0
    %124 = vmatprep.subr.mxu0 0.0
    %125 = vmatpush1.xpose.msra.mxu0 0.0
    %126 = vmatprep.subr.mxu0 0.0
    %127 = vmatpush1.xpose.msra.mxu0 0.0
    %128 = vmatprep.subr.mxu0 0.0
    %129 = vmatpush1.xpose.msra.mxu0 0.0
    %130 = vmatprep.subr.mxu0 0.0
    %131 = vmatpush1.xpose.msra.mxu0 0.0
    %132 = vmatprep.subr.mxu0 0.0
    %133 = vmatpush1.xpose.msra.mxu0 0.0
    %134 = vmatprep.subr.mxu0 0.0
    %135 = vmatpush1.xpose.msra.mxu0 0.0
    %136 = vmatprep.subr.mxu0 0.0
    %137 = vmatpush1.xpose.msra.mxu0 0.0
    %138 = vmatprep.mubr.f32.mxu0 0.0
    %139 = vmatmul.mubr.f32.gmra.mrb[0].mxu0 %v63
    %v140 = vpop.f32.mrb[0].mxu0
    %v141 = vadd.f32 0.0, %v140
    %v142 = vpop.f32.mrb[0].mxu0
    %143 = vmatprep.mubr.f32.mxu0 0.0
    %144 = vmatmul.mubr.f32.gmra.mrb[0].mxu0 %v66
    %v145 = vpop.f32.mrb[0].mxu0
    %v146 = vadd.f32 0.0, %v145
    %v147 = vpop.f32.mrb[0].mxu0
    %148 = vdwg.mxu0
    %150 = vset.pattern.permute.xlu0 0
    %151 = vperm.xlu0 %150, %v58
    %v152 = vpop.permute.xlu0 %151
    %155 = vset.pattern.permute.xlu0 0
    %156 = vperm.xlu0 %155, %v59
    %v157 = vpop.permute.xlu0 %156
    %v160 = vlaneseq
    %v161 = vshrl.u32 %v160, 7
    %v162 = vsub.s32 0, %v161
    %v163 = vrot.slane %v60, %v162
    %v165 = vadd.f32 %v152, %v163
    %v166 = vadd.f32 %v157, %v163
    %v167 = vmul.f32 %v141, 2.0
    %v168 = vmul.f32 %v146, 2.0
    %v169 = vsub.f32 %v165, %v167
    %v170 = vsub.f32 %v166, %v168
    %v171 = vmax.f32 %v169, 1e-22
    %v172 = vmax.f32 %v170, 1e-22
    %v173 = vld [vmem:[%s2] sm:$0xff]
    %v174 = vld [vmem:[%s2 + $0x8] sm:$0xff]
    %v175 = vld [vmem:[%s3] sm:$0xff]
    %v176 = vld [vmem:[%s3 + $0x8] sm:$0xff]
    %v177 = vld [vmem:[%s6] sm:$0xff]
    %v178 = vld [vmem:[%s6 + $0x8] sm:$0xff]
    %v179 = vld [vmem:[%s7] sm:$0x1]
    %vm180 = vcmask 64512
    %v182 = vsel %vm180, %v173, 0
    %v185 = vsel %vm180, %v174, 0
    %v188 = vsel %vm180, %v175, 0
    %v191 = vsel %vm180, %v176, 0
    %193 = vmatprep.subr.mxu0 0.0
    %194 = vmatpush1.xpose.msra.mxu0 %v188
    %195 = vmatprep.subr.mxu0 0.0
    %196 = vmatpush1.xpose.msra.mxu0 %v191
    %197 = vmatprep.subr.mxu0 0.0
    %198 = vmatpush1.xpose.msra.mxu0 0.0
    %199 = vmatprep.subr.mxu0 0.0
    %200 = vmatpush1.xpose.msra.mxu0 0.0
    %201 = vmatprep.subr.mxu0 0.0
    %202 = vmatpush1.xpose.msra.mxu0 0.0
    %203 = vmatprep.subr.mxu0 0.0
    %204 = vmatpush1.xpose.msra.mxu0 0.0
    %205 = vmatprep.subr.mxu0 0.0
    %206 = vmatpush1.xpose.msra.mxu0 0.0
    %207 = vmatprep.subr.mxu0 0.0
    %208 = vmatpush1.xpose.msra.mxu0 0.0
    %209 = vmatprep.subr.mxu0 0.0
    %210 = vmatpush1.xpose.msra.mxu0 0.0
    %211 = vmatprep.subr.mxu0 0.0
    %212 = vmatpush1.xpose.msra.mxu0 0.0
    %213 = vmatprep.subr.mxu0 0.0
    %214 = vmatpush1.xpose.msra.mxu0 0.0
    %215 = vmatprep.subr.mxu0 0.0
    %216 = vmatpush1.xpose.msra.mxu0 0.0
    %217 = vmatprep.subr.mxu0 0.0
    %218 = vmatpush1.xpose.msra.mxu0 0.0
    %219 = vmatprep.subr.mxu0 0.0
    %220 = vmatpush1.xpose.msra.mxu0 0.0
    %221 = vmatprep.subr.mxu0 0.0
    %222 = vmatpush1.xpose.msra.mxu0 0.0
    %223 = vmatprep.subr.mxu0 0.0
    %224 = vmatpush1.xpose.msra.mxu0 0.0
    %225 = vmatprep.subr.mxu0 0.0
    %226 = vmatpush1.xpose.msra.mxu0 0.0
    %227 = vmatprep.subr.mxu0 0.0
    %228 = vmatpush1.xpose.msra.mxu0 0.0
    %229 = vmatprep.subr.mxu0 0.0
    %230 = vmatpush1.xpose.msra.mxu0 0.0
    %231 = vmatprep.subr.mxu0 0.0
    %232 = vmatpush1.xpose.msra.mxu0 0.0
    %233 = vmatprep.subr.mxu0 0.0
    %234 = vmatpush1.xpose.msra.mxu0 0.0
    %235 = vmatprep.subr.mxu0 0.0
    %236 = vmatpush1.xpose.msra.mxu0 0.0
    %237 = vmatprep.subr.mxu0 0.0
    %238 = vmatpush1.xpose.msra.mxu0 0.0
    %239 = vmatprep.subr.mxu0 0.0
    %240 = vmatpush1.xpose.msra.mxu0 0.0
    %241 = vmatprep.subr.mxu0 0.0
    %242 = vmatpush1.xpose.msra.mxu0 0.0
    %243 = vmatprep.subr.mxu0 0.0
    %244 = vmatpush1.xpose.msra.mxu0 0.0
    %245 = vmatprep.subr.mxu0 0.0
    %246 = vmatpush1.xpose.msra.mxu0 0.0
    %247 = vmatprep.subr.mxu0 0.0
    %248 = vmatpush1.xpose.msra.mxu0 0.0
    %249 = vmatprep.subr.mxu0 0.0
    %250 = vmatpush1.xpose.msra.mxu0 0.0
    %251 = vmatprep.subr.mxu0 0.0
    %252 = vmatpush1.xpose.msra.mxu0 0.0
    %253 = vmatprep.subr.mxu0 0.0
    %254 = vmatpush1.xpose.msra.mxu0 0.0
    %255 = vmatprep.subr.mxu0 0.0
    %256 = vmatpush1.xpose.msra.mxu0 0.0
    %257 = vmatprep.mubr.f32.mxu0 0.0
    %258 = vmatmul.mubr.f32.gmra.mrb[0].mxu0 %v182
    %v259 = vpop.f32.mrb[0].mxu0
    %v260 = vadd.f32 0.0, %v259
    %v261 = vpop.f32.mrb[0].mxu0
    %262 = vmatprep.mubr.f32.mxu0 0.0
    %263 = vmatmul.mubr.f32.gmra.mrb[0].mxu0 %v185
    %v264 = vpop.f32.mrb[0].mxu0
    %v265 = vadd.f32 0.0, %v264
    %v266 = vpop.f32.mrb[0].mxu0
    %267 = vdwg.mxu0
    %269 = vset.pattern.permute.xlu0 0
    %270 = vperm.xlu0 %269, %v177
    %v271 = vpop.permute.xlu0 %270
    %274 = vset.pattern.permute.xlu0 0
    %275 = vperm.xlu0 %274, %v178
    %v276 = vpop.permute.xlu0 %275
    %v279 = vlaneseq
    %v280 = vshrl.u32 %v279, 7
    %v281 = vsub.s32 0, %v280
    %v282 = vrot.slane %v179, %v281
    %v284 = vadd.f32 %v271, %v282
    %v285 = vadd.f32 %v276, %v282
    %v286 = vmul.f32 %v260, 2.0
    %v287 = vmul.f32 %v265, 2.0
    %v288 = vsub.f32 %v284, %v286
    %v289 = vsub.f32 %v285, %v287
    %v290 = vmax.f32 %v288, 1e-22
    %v291 = vmax.f32 %v289, 1e-22
    %s292 = smul.u32 0, 16
    %v293 = vlaneseq
    %v294 = vshrl.u32 %v293, 7
    %v295 = vadd.s32 %v294, 8
    %v296 = vstv %s292
    %v297 = vadd.s32 %v296, %v294
    %v298 = vadd.s32 %v296, %v295
    %s299 = smul.u32 0, 16
    %v300 = vlaneseq
    %v301 = vand.u32 %v300, 127
    %v302 = vstv %s299
    %v303 = vadd.s32 %v302, %v301
    %vm304 = vcmp.eq.s32.totalorder %v297, %v303
    %vm305 = vcmp.eq.s32.totalorder %v298, %v303
    %v306 = vsel %vm304, 1e-22, %v171
    %v307 = vsel %vm305, 1e-22, %v172
    %v308 = vsel %vm304, 1e-22, %v290
    %v309 = vsel %vm305, 1e-22, %v291
    %v310 = vld [vmem:[%s8] sm:$0xff]
    %v311 = vld [vmem:[%s8 + $0x8] sm:$0xff]
    %v312 = vld [vmem:[%s10] sm:$0xff]
    %v313 = vld [vmem:[%s10 + $0x8] sm:$0xff]
    %315 = vset.pattern.permute.xlu0 0
    %316 = vperm.xlu0 %315, %v310
    %v317 = vpop.permute.xlu0 %316
    %320 = vset.pattern.permute.xlu0 0
    %321 = vperm.xlu0 %320, %v311
    %v322 = vpop.permute.xlu0 %321
    %v324 = vsub.f32 %v306, %v317
    %v325 = vsub.f32 %v307, %v322
    %327 = vset.pattern.permute.xlu0 0
    %328 = vperm.xlu0 %327, %v312
    %v329 = vpop.permute.xlu0 %328
    %332 = vset.pattern.permute.xlu0 0
    %333 = vperm.xlu0 %332, %v313
    %v334 = vpop.permute.xlu0 %333
    %v336 = vmul.f32 %v324, %v329
    %v337 = vmul.f32 %v325, %v334
    %v338 = vmax.f32 %v336, 0.0
    %v339 = vmax.f32 %v337, 0.0
    %v340 = vmul.f32 %v338, 0.01
    %v341 = vmul.f32 %v339, 0.01
    %v342 = vadd.f32 %v340, 1.0
    %v343 = vadd.f32 %v341, 1.0
    %v344 = vlog2.pop %v342
    %v345 = vmul.f32 %v344, 0.6931472
    %v346 = vlog2.pop %v343
    %v347 = vmul.f32 %v346, 0.6931472
    %v348 = vmul.f32 %v345, -50.5
    %v349 = vmul.f32 %v347, -50.5
    %v350 = vmul.f32 %v348, 1.442695
    %v351 = vpow.pop %v350
    %v352 = vmul.f32 %v349, 1.442695
    %v353 = vpow.pop %v352
    %v354 = vmul.f32 %v351, 0.9950126
    %v355 = vmul.f32 %v353, 0.9950126
    %v356 = vld [vmem:[%s9] sm:$0x1]
    %v357 = vld [vmem:[%s11] sm:$0x1]
    %v359 = vlaneseq
    %v360 = vshrl.u32 %v359, 7
    %v361 = vsub.s32 0, %v360
    %v362 = vrot.slane %v356, %v361
    %v364 = vsub.f32 %v306, %v362
    %v365 = vsub.f32 %v307, %v362
    %v367 = vlaneseq
    %v368 = vshrl.u32 %v367, 7
    %v369 = vsub.s32 0, %v368
    %v370 = vrot.slane %v357, %v369
    %v372 = vmul.f32 %v364, %v370
    %v373 = vmul.f32 %v365, %v370
    %v374 = vmax.f32 %v372, 0.0
    %v375 = vmax.f32 %v373, 0.0
    %v376 = vmul.f32 %v374, 0.01
    %v377 = vmul.f32 %v375, 0.01
    %v378 = vadd.f32 %v376, 1.0
    %v379 = vadd.f32 %v377, 1.0
    %v380 = vlog2.pop %v378
    %v381 = vmul.f32 %v380, 0.6931472
    %v382 = vlog2.pop %v379
    %v383 = vmul.f32 %v382, 0.6931472
    %v384 = vmul.f32 %v381, -50.5
    %v385 = vmul.f32 %v383, -50.5
    %v386 = vmul.f32 %v384, 1.442695
    %v387 = vpow.pop %v386
    %v388 = vmul.f32 %v385, 1.442695
    %v389 = vpow.pop %v388
    %v390 = vmul.f32 %v387, 0.9950126
    %v391 = vmul.f32 %v389, 0.9950126
    %v392 = vadd.f32 %v354, %v390
    %v393 = vadd.f32 %v355, %v391
    %v394 = vmul.f32 %v354, %v390
    %v395 = vmul.f32 %v355, %v391
    %v396 = vsub.f32 %v392, %v394
    %v397 = vsub.f32 %v393, %v395
    %v398 = vmax.f32 %v308, 0.0
    %v399 = vmax.f32 %v309, 0.0
    %v400 = vadd.f32 %v398, 1.0
    %v401 = vadd.f32 %v399, 1.0
    %v402 = vrcp.pop %v400
    %v403 = vrcp.pop %v401
    %v404 = vmul.f32 %v402, 0.63661975
    %v405 = vmul.f32 %v403, 0.63661975
    %v406 = vmul.f32 %v404, 2.0
    %v407 = vmul.f32 %v405, 2.0
    %v408 = vmul.f32 %v404, %v404
    %v409 = vmul.f32 %v405, %v405
    %v410 = vsub.f32 %v406, %v408
    %v411 = vsub.f32 %v407, %v409
    %v412 = vadd.f32 %v410, 1e-12
    %v413 = vadd.f32 %v411, 1e-12
    %v414 = vlog2.pop %v412
    %v415 = vmul.f32 %v414, 0.6931472
    %v416 = vlog2.pop %v413
    %v417 = vmul.f32 %v416, 0.6931472
    %v418 = vmul.f32 %v396, %v415
    %v419 = vmul.f32 %v397, %v417
    %v420 = vsub.f32 1.0, %v396
    %v421 = vsub.f32 1.0, %v397
    %v422 = vsub.f32 1.0, %v410
    %v423 = vsub.f32 1.0, %v411
    %v424 = vadd.f32 %v422, 1e-12
    %v425 = vadd.f32 %v423, 1e-12
    %v426 = vlog2.pop %v424
    %v427 = vmul.f32 %v426, 0.6931472
    %v428 = vlog2.pop %v425
    %v429 = vmul.f32 %v428, 0.6931472
    %v430 = vmul.f32 %v420, %v427
    %v431 = vmul.f32 %v421, %v429
    %v432 = vadd.f32 %v418, %v430
    %v433 = vadd.f32 %v419, %v431
    %v434 = vld [vmem:[#allocation2] sm:$0xff]
    %vm435 = vcmask 130048
    %v436 = vsel %vm435, %v432, 0.0
    %v437 = vsel %vm435, %v433, 0.0
    %v438 = vadd.f32 %v436, %v437
    %439 = vadd.xlane.f32.xlu0 %v438
    %v440 = vpop.xlane.xlu0 %439
    %v441 = vrot.slane %v440, 4
    %v442 = vadd.f32 %v440, %v441
    %v443 = vrot.slane %v442, 2
    %v444 = vadd.f32 %v442, %v443
    %v445 = vrot.slane %v444, 1
    %v446 = vadd.f32 %v444, %v445
    %s447 = vtos %v446
    %v448 = vstv %s447
    %v449 = vadd.f32 %v434, %v448
    %450 = vst [vmem:[#allocation2] sm:$0xff] %v449
    %451 = vst.msk [vmem:[#allocation4] sm:$0xff] %vm435, %v306
    %452 = vst.msk [vmem:[#allocation4 + $0x8] sm:$0xff] %vm435, %v307
    %453 = vst.msk [vmem:[#allocation6] sm:$0xff] %vm435, %v308
    %454 = vst.msk [vmem:[#allocation6 + $0x8] sm:$0xff] %vm435, %v309
    %455 = vst.msk [vmem:[#allocation7] sm:$0xff] %vm435, %v396
    %456 = vst.msk [vmem:[#allocation7 + $0x8] sm:$0xff] %vm435, %v397
    %457 = vst.msk [vmem:[#allocation9] sm:$0xff] %vm435, %v410
    %458 = vst.msk [vmem:[#allocation9 + $0x8] sm:$0xff] %vm435, %v411
    // Predicated region
    $region54: #{tpu_custom_call.1} parent=1 // pred_check
      _
    $region55: #{tpu_custom_call.1} parent=1 // pred_check_branch
      %460 = sbr.rel (0) target = $region57
    $region56: #{tpu_custom_call.1} parent=1 // pred_region
      %s462 = ssub.s32 128, 128
      %463 = vsyncadd [#allocation3], %s462
      %s465 = sshll.u32 [#allocation2], 4
      %s466 = int_to_ptr.vmem [resolvable:$true] %s465
      %468 = dma.vmem_to_hbm [thread:$0]  %s466, 128, %s12, [#allocation3]
    $region57: #{tpu_custom_call.1} parent=1 // pred_fallthru
      _
    // Predicated region
    $region58: #{tpu_custom_call.1} parent=1 // pred_check
      _
    $region59: #{tpu_custom_call.1} parent=1 // pred_check_branch
      %470 = sbr.rel (0) target = $region61
    $region60: #{tpu_custom_call.1} parent=1 // pred_region
      %s472 = ssub.s32 256, 256
      %473 = vsyncadd [#allocation5], %s472
      %s474 = sshll.u32 [#allocation4], 4
      %s475 = int_to_ptr.vmem [resolvable:$true] %s474
      %480 = dma.vmem_to_hbm [thread:$0]  %s475, 256, %s13, [#allocation5], 128, 128, 8
    $region61: #{tpu_custom_call.1} parent=1 // pred_fallthru
      _
    // Predicated region
    $region62: #{tpu_custom_call.1} parent=1 // pred_check
      _
    $region63: #{tpu_custom_call.1} parent=1 // pred_check_branch
      %482 = sbr.rel (0) target = $region65
    $region64: #{tpu_custom_call.1} parent=1 // pred_region
      %s484 = ssub.s32 256, 256
      %485 = vsyncadd [#allocation5], %s484
      %s486 = sshll.u32 [#allocation6], 4
      %s487 = int_to_ptr.vmem [resolvable:$true] %s486
      %492 = dma.vmem_to_hbm [thread:$0]  %s487, 256, %s14, [#allocation5], 128, 128, 8
    $region65: #{tpu_custom_call.1} parent=1 // pred_fallthru
      _
    // Predicated region
    $region66: #{tpu_custom_call.1} parent=1 // pred_check
      _
    $region67: #{tpu_custom_call.1} parent=1 // pred_check_branch
      %494 = sbr.rel (0) target = $region69
    $region68: #{tpu_custom_call.1} parent=1 // pred_region
      %s496 = ssub.s32 256, 256
      %497 = vsyncadd [#allocation8], %s496
      %s498 = sshll.u32 [#allocation7], 4
      %s499 = int_to_ptr.vmem [resolvable:$true] %s498
      %504 = dma.vmem_to_hbm [thread:$0]  %s499, 256, %s15, [#allocation8], 128, 128, 8
    $region69: #{tpu_custom_call.1} parent=1 // pred_fallthru
      _
    // Predicated region
    $region70: #{tpu_custom_call.1} parent=1 // pred_check
      _
    $region71: #{tpu_custom_call.1} parent=1 // pred_check_branch
      %506 = sbr.rel (0) target = $region73
    $region72: #{tpu_custom_call.1} parent=1 // pred_region
      %s508 = ssub.s32 256, 256
      %509 = vsyncadd [#allocation8], %s508
      %s510 = sshll.u32 [#allocation9], 4
      %s511 = int_to_ptr.vmem [resolvable:$true] %s510
      %516 = dma.vmem_to_hbm [thread:$0]  %s511, 256, %s16, [#allocation8], 128, 128, 8
    $region73: #{tpu_custom_call.1} parent=1 // pred_fallthru
      _
    // Predicated region
    $region74: #{tpu_custom_call.1} parent=1 // pred_check
      _
    $region75: #{tpu_custom_call.1} parent=1 // pred_check_branch
      %518 = sbr.rel (0) target = $region77
    $region76: #{tpu_custom_call.1} parent=1 // pred_region
      %519 = dma.done [#allocation3], 128
    $region77: #{tpu_custom_call.1} parent=1 // pred_fallthru
      _
    // Predicated region
    $region78: #{tpu_custom_call.1} parent=1 // pred_check
      _
    $region79: #{tpu_custom_call.1} parent=1 // pred_check_branch
      %521 = sbr.rel (0) target = $region81
    $region80: #{tpu_custom_call.1} parent=1 // pred_region
      %522 = dma.done [#allocation5], 256
    $region81: #{tpu_custom_call.1} parent=1 // pred_fallthru
      _
    // Predicated region
    $region82: #{tpu_custom_call.1} parent=1 // pred_check
      _
    $region83: #{tpu_custom_call.1} parent=1 // pred_check_branch
      %524 = sbr.rel (0) target = $region85
    $region84: #{tpu_custom_call.1} parent=1 // pred_region
      %525 = dma.done [#allocation5], 256
    $region85: #{tpu_custom_call.1} parent=1 // pred_fallthru
      _
    // Predicated region
    $region86: #{tpu_custom_call.1} parent=1 // pred_check
      _
    $region87: #{tpu_custom_call.1} parent=1 // pred_check_branch
      %527 = sbr.rel (0) target = $region89
    $region88: #{tpu_custom_call.1} parent=1 // pred_region
      %528 = dma.done [#allocation8], 256
    $region89: #{tpu_custom_call.1} parent=1 // pred_fallthru
      _
    // Predicated region
    $region90: #{tpu_custom_call.1} parent=1 // pred_check
      _
    $region91: #{tpu_custom_call.1} parent=1 // pred_check_branch
      %530 = sbr.rel (0) target = $region93
    $region92: #{tpu_custom_call.1} parent=1 // pred_region
      %531 = dma.done [#allocation8], 256
    $region93: #{tpu_custom_call.1} parent=1 // pred_fallthru
      _
    %532 = vsyncpa [#allocation3], 1
    %533 = vsyncpa [#allocation5], 1
    %534 = vsyncpa [#allocation8], 1

</llo_original>
